<compile_context>
chip_gen: v5e
topology: v5e:2x2
jax: 0.10.0
libtpu: 0.0.40
codegen_flags: <defaults>
</compile_context>

<pallas_src>
import math

import jax
import jax.numpy as jnp
from jax.experimental import pallas as pl
from jax.experimental.pallas import tpu as pltpu

# ---------------- model config (small, consistent with the module) ----------
BATCH = 2
SEQ = 8
HIDDEN = 32            # hidden_dim
NUM_LATENT = 16        # num_latent_vectors (small synthetic value)
NUM_HEADS = 8
HEAD_DIM = HIDDEN // NUM_HEADS
LN_EPS = 1e-5


def latent_attention_kernel(x_ref, wqk_ref, seg_ref, vo_ref, slab_ref, o_ref):
    x = x_ref[...]                                                   # (B*S, H) f32

    # Small constants, packed in one slab (static slices, zero runtime cost).
    bqk = slab_ref[0:1, :]                                           # (1, nh*L)
    bo = slab_ref[1:2, :HIDDEN]                                      # (1, H)
    gamma = slab_ref[2:3, :HIDDEN]                                   # (1, H)
    beta = slab_ref[3:4, :HIDDEN]                                    # (1, H)

    # Scores for all heads in ONE matmul; Wq, the score scale, and the
    # block-diag-by-head K expansion are all folded into wqk_ref / bqk.
    s = jnp.dot(x, wqk_ref[...], preferred_element_type=jnp.float32) + bqk

    # Segmented (per-head) softmax.  Subtracting the per-row global max is
    # algebraically exact for every head's softmax; the epsilon clamp guards
    # against all-underflow within a segment.
    m = jnp.max(s, axis=-1, keepdims=True)
    e = jnp.exp(s - m)
    denom = jnp.dot(e, seg_ref[...], preferred_element_type=jnp.float32)
    p = e / jnp.maximum(denom, 1e-30)                                # (B*S, nh*L)

    # Context + output projection in ONE matmul (Wo folded into Vo).
    out = jnp.dot(p, vo_ref[...], preferred_element_type=jnp.float32) + bo

    # Residual + LayerNorm over hidden dim.
    res = out + x
    mean = jnp.mean(res, axis=-1, keepdims=True)
    var = jnp.mean((res - mean) ** 2, axis=-1, keepdims=True)
    y = (res - mean) * jax.lax.rsqrt(var + LN_EPS)
    o_ref[...] = (y * gamma + beta).astype(o_ref.dtype)


def prepare_kernel_params(p):
    """Fold all input-independent work into kernel constants:
    latent K/V projections, per-head block-diagonal expansion, score scale,
    Q-projection fold (Wqk, bqk), output-projection fold (Vo), the segment-sum
    matrix, and a single slab for the small vectors."""
    L, H = p["key"].shape
    hd = H // NUM_HEADS
    LH = NUM_HEADS * L

    k_proj = p["key"] @ p["wk_t"] + p["bk"]          # (L, H)
    v_proj = p["value"] @ p["wv_t"] + p["bv"]        # (L, H)

    def expand_block_diag(t):
        # (L, H) -> (nh*L, H); row h*L+l holds head-h slice of t[l], placed in
        # columns [h*hd, (h+1)*hd), zeros elsewhere.
        th = t.reshape(L, NUM_HEADS, hd).transpose(1, 0, 2)          # (nh, L, hd)
        eye = jnp.eye(NUM_HEADS, dtype=t.dtype)
        blk = th[:, :, None, :] * eye[:, None, :, None]              # (nh, L, nh, hd)
        return blk.reshape(LH, H)

    scale = 1.0 / math.sqrt(hd)
    k_exp_t = expand_block_diag(k_proj).T * scale                    # (H, nh*L)
    v_exp = expand_block_diag(v_proj)                                # (nh*L, H)

    # Fold Q projection into the score matmul and Wo into the context matmul.
    wqk = p["wq_t"] @ k_exp_t                                        # (H, nh*L)
    bqk = p["bq"] @ k_exp_t                                          # (1, nh*L)
    vo = v_exp @ p["wo_t"]                                           # (nh*L, H)

    seg = jnp.arange(LH) // L
    seg_mat = (seg[:, None] == seg[None, :]).astype(jnp.float32)     # (nh*L, nh*L)

    # One padded slab for all small vectors: bqk / bo / gamma / beta.
    slab = jnp.zeros((4, LH), jnp.float32)
    slab = slab.at[0, :].set(bqk[0])
    slab = slab.at[1, :H].set(p["bo"][0])
    slab = slab.at[2, :H].set(p["ln_gamma"][0])
    slab = slab.at[3, :H].set(p["ln_beta"][0])

    return {"wqk": wqk, "vo": vo, "seg_mat": seg_mat, "slab": slab}


def latent_attention(hidden_states, kp):
    """hidden_states: (B, S, H) float32. kp: dict from prepare_kernel_params."""
    B, S, H = hidden_states.shape
    BS = B * S

    # Single ungridded invocation: whole problem fits one VMEM-resident block.
    x2d = hidden_states.reshape(BS, H)
    vspec = lambda: pl.BlockSpec(memory_space=pltpu.MemorySpace.VMEM)

    out2d = pl.pallas_call(
        latent_attention_kernel,
        out_shape=jax.ShapeDtypeStruct((BS, H), hidden_states.dtype),
        in_specs=[vspec(), vspec(), vspec(), vspec(), vspec()],
        out_specs=vspec(),
    )(x2d, kp["wqk"], kp["seg_mat"], kp["vo"], kp["slab"])

    return out2d.reshape(B, S, H)


def build_params(key):
    """Deterministic synthetic parameters matching nn.MultiheadAttention /
    nn.LayerNorm / latent key & value shapes."""
    ks = jax.random.split(key, 8)

    def xavier(k, shape):
        fan_in, fan_out = shape[1], shape[0]
        limit = math.sqrt(6.0 / (fan_in + fan_out))
        return jax.random.uniform(k, shape, jnp.float32, -limit, limit)

    lat_key = xavier(ks[0], (NUM_LATENT, HIDDEN))
    lat_val = xavier(ks[1], (NUM_LATENT, HIDDEN))

    # in_proj_weight is (3H, H) in PyTorch; split into Wq/Wk/Wv and transpose.
    in_proj_w = xavier(ks[2], (3 * HIDDEN, HIDDEN))
    wq = in_proj_w[:HIDDEN]
    wk = in_proj_w[HIDDEN:2 * HIDDEN]
    wv = in_proj_w[2 * HIDDEN:]
    in_proj_b = 0.02 * jax.random.normal(ks[3], (3 * HIDDEN,), jnp.float32)
    bq, bk, bv = in_proj_b[:HIDDEN], in_proj_b[HIDDEN:2 * HIDDEN], in_proj_b[2 * HIDDEN:]

    wo = xavier(ks[4], (HIDDEN, HIDDEN))
    bo = 0.02 * jax.random.normal(ks[5], (HIDDEN,), jnp.float32)

    ln_gamma = jnp.ones((HIDDEN,), jnp.float32)
    ln_beta = jnp.zeros((HIDDEN,), jnp.float32)

    return {
        "key": lat_key, "value": lat_val,
        "wq_t": wq.T, "wk_t": wk.T, "wv_t": wv.T, "wo_t": wo.T,
        "bq": bq.reshape(1, HIDDEN), "bk": bk.reshape(1, HIDDEN),
        "bv": bv.reshape(1, HIDDEN), "bo": bo.reshape(1, HIDDEN),
        "ln_gamma": ln_gamma.reshape(1, HIDDEN),
        "ln_beta": ln_beta.reshape(1, HIDDEN),
    }


def latent_attention_ref(x, p):
    """Pure-JAX reference of the same forward (eval-mode MHA + LayerNorm)."""
    B, S, H = x.shape
    L = p["key"].shape[0]
    q = x @ p["wq_t"] + p["bq"]                                  # (B,S,H)
    k = p["key"] @ p["wk_t"] + p["bk"]                           # (L,H)
    v = p["value"] @ p["wv_t"] + p["bv"]                         # (L,H)
    qh = q.reshape(B, S, NUM_HEADS, HEAD_DIM)
    kh = k.reshape(L, NUM_HEADS, HEAD_DIM)
    vh = v.reshape(L, NUM_HEADS, HEAD_DIM)
    s = jnp.einsum("bshd,lhd->bhsl", qh, kh) / math.sqrt(HEAD_DIM)
    pattn = jax.nn.softmax(s, axis=-1)
    ctx = jnp.einsum("bhsl,lhd->bshd", pattn, vh).reshape(B, S, H)
    out = ctx @ p["wo_t"] + p["bo"]
    res = out + x
    mean = res.mean(-1, keepdims=True)
    var = ((res - mean) ** 2).mean(-1, keepdims=True)
    return (res - mean) / jnp.sqrt(var + LN_EPS) * p["ln_gamma"] + p["ln_beta"]


if __name__ == "__main__":
    root = jax.random.PRNGKey(0)
    k_x, k_p = jax.random.split(root)

    hidden_states = jax.random.normal(k_x, (BATCH, SEQ, HIDDEN), jnp.float32)
    params = build_params(k_p)

    kernel_params = prepare_kernel_params(params)   # input-independent, done once
    out = latent_attention(hidden_states, kernel_params)
    out = jax.block_until_ready(out)

    ref = latent_attention_ref(hidden_states, params)
    assert out.shape == (BATCH, SEQ, HIDDEN)
    assert jnp.allclose(out, ref, atol=1e-4, rtol=1e-4), "mismatch vs JAX reference"

    print("KERNEL_OK")
</pallas_src>

<mosaic_0001>
module attributes {stable_mosaic.version = 11 : i64} {
  func.func @latent_attention_kernel(%arg0: memref<16x32xf32, #tpu.memory_space<vmem>>, %arg1: memref<32x128xf32, #tpu.memory_space<vmem>>, %arg2: memref<128x128xf32, #tpu.memory_space<vmem>>, %arg3: memref<128x32xf32, #tpu.memory_space<vmem>>, %arg4: memref<4x128xf32, #tpu.memory_space<vmem>>, %arg5: memref<16x32xf32, #tpu.memory_space<vmem>>) attributes {dimension_semantics = [], scalar_prefetch = 0 : i64, scratch_operands = 0 : i64, tpu.core_type = #tpu.core_type<tc>} {
    %c0 = arith.constant 0 : index
    %c0_0 = arith.constant 0 : index
    %0 = vector.load %arg0[%c0, %c0_0] : memref<16x32xf32, #tpu.memory_space<vmem>>, vector<16x32xf32>
    %c0_1 = arith.constant 0 : index
    %c0_2 = arith.constant 0 : index
    %1 = vector.load %arg4[%c0_1, %c0_2] : memref<4x128xf32, #tpu.memory_space<vmem>>, vector<1x128xf32>
    %c1 = arith.constant 1 : index
    %c0_3 = arith.constant 0 : index
    %2 = vector.load %arg4[%c1, %c0_3] : memref<4x128xf32, #tpu.memory_space<vmem>>, vector<1x32xf32>
    %c2 = arith.constant 2 : index
    %c0_4 = arith.constant 0 : index
    %3 = vector.load %arg4[%c2, %c0_4] : memref<4x128xf32, #tpu.memory_space<vmem>>, vector<1x32xf32>
    %c3 = arith.constant 3 : index
    %c0_5 = arith.constant 0 : index
    %4 = vector.load %arg4[%c3, %c0_5] : memref<4x128xf32, #tpu.memory_space<vmem>>, vector<1x32xf32>
    %c0_6 = arith.constant 0 : index
    %c0_7 = arith.constant 0 : index
    %5 = vector.load %arg1[%c0_6, %c0_7] : memref<32x128xf32, #tpu.memory_space<vmem>>, vector<32x128xf32>
    %cst = arith.constant dense<0.000000e+00> : vector<16x128xf32>
    %6 = tpu.matmul %0, %5, %cst {dimension_numbers = #tpu.dot_dimension_numbers<[1], [0], [0], [1], [0, 0, 1, 1], [], []>} : vector<16x32xf32>, vector<32x128xf32>, vector<16x128xf32> -> vector<16x128xf32>
    %7 = vector.broadcast %1 : vector<1x128xf32> to vector<16x128xf32>
    %8 = arith.addf %6, %7 : vector<16x128xf32>
    %cst_8 = arith.constant dense<0xFF800000> : vector<16xf32>
    %9 = vector.multi_reduction <maximumf>, %8, %cst_8 [1] : vector<16x128xf32> to vector<16xf32>
    %10 = vector.shape_cast %9 : vector<16xf32> to vector<16x1xf32>
    %11 = vector.broadcast %10 : vector<16x1xf32> to vector<16x128xf32>
    %12 = arith.subf %8, %11 : vector<16x128xf32>
    %13 = math.exp %12 : vector<16x128xf32>
    %c0_9 = arith.constant 0 : index
    %c0_10 = arith.constant 0 : index
    %14 = vector.load %arg2[%c0_9, %c0_10] : memref<128x128xf32, #tpu.memory_space<vmem>>, vector<128x128xf32>
    %cst_11 = arith.constant dense<0.000000e+00> : vector<16x128xf32>
    %15 = tpu.matmul %13, %14, %cst_11 {dimension_numbers = #tpu.dot_dimension_numbers<[1], [0], [0], [1], [0, 0, 1, 1], [], []>} : vector<16x128xf32>, vector<128x128xf32>, vector<16x128xf32> -> vector<16x128xf32>
    %cst_12 = arith.constant 1.000000e-30 : f32
    %16 = vector.broadcast %cst_12 : f32 to vector<16x128xf32>
    %17 = arith.maximumf %15, %16 : vector<16x128xf32>
    %18 = arith.divf %13, %17 : vector<16x128xf32>
    %c0_13 = arith.constant 0 : index
    %c0_14 = arith.constant 0 : index
    %19 = vector.load %arg3[%c0_13, %c0_14] : memref<128x32xf32, #tpu.memory_space<vmem>>, vector<128x32xf32>
    %cst_15 = arith.constant dense<0.000000e+00> : vector<16x32xf32>
    %20 = tpu.matmul %18, %19, %cst_15 {dimension_numbers = #tpu.dot_dimension_numbers<[1], [0], [0], [1], [0, 0, 1, 1], [], []>} : vector<16x128xf32>, vector<128x32xf32>, vector<16x32xf32> -> vector<16x32xf32>
    %21 = vector.broadcast %2 : vector<1x32xf32> to vector<16x32xf32>
    %22 = arith.addf %20, %21 : vector<16x32xf32>
    %23 = arith.addf %22, %0 : vector<16x32xf32>
    %cst_16 = arith.constant dense<0.000000e+00> : vector<16xf32>
    %24 = vector.multi_reduction <add>, %23, %cst_16 [1] : vector<16x32xf32> to vector<16xf32>
    %25 = vector.shape_cast %24 : vector<16xf32> to vector<16x1xf32>
    %cst_17 = arith.constant 3.200000e+01 : f32
    %26 = vector.broadcast %cst_17 : f32 to vector<16x1xf32>
    %27 = arith.divf %25, %26 : vector<16x1xf32>
    %28 = vector.broadcast %27 : vector<16x1xf32> to vector<16x32xf32>
    %29 = arith.subf %23, %28 : vector<16x32xf32>
    %30 = arith.mulf %29, %29 : vector<16x32xf32>
    %cst_18 = arith.constant dense<0.000000e+00> : vector<16xf32>
    %31 = vector.multi_reduction <add>, %30, %cst_18 [1] : vector<16x32xf32> to vector<16xf32>
    %32 = vector.shape_cast %31 : vector<16xf32> to vector<16x1xf32>
    %cst_19 = arith.constant 3.200000e+01 : f32
    %33 = vector.broadcast %cst_19 : f32 to vector<16x1xf32>
    %34 = arith.divf %32, %33 : vector<16x1xf32>
    %35 = vector.broadcast %27 : vector<16x1xf32> to vector<16x32xf32>
    %36 = arith.subf %23, %35 : vector<16x32xf32>
    %cst_20 = arith.constant 9.99999974E-6 : f32
    %37 = vector.broadcast %cst_20 : f32 to vector<16x1xf32>
    %38 = arith.addf %34, %37 : vector<16x1xf32>
    %39 = math.rsqrt %38 : vector<16x1xf32>
    %40 = vector.broadcast %39 : vector<16x1xf32> to vector<16x32xf32>
    %41 = arith.mulf %36, %40 : vector<16x32xf32>
    %42 = vector.broadcast %3 : vector<1x32xf32> to vector<16x32xf32>
    %43 = arith.mulf %41, %42 : vector<16x32xf32>
    %44 = vector.broadcast %4 : vector<1x32xf32> to vector<16x32xf32>
    %45 = arith.addf %43, %44 : vector<16x32xf32>
    %c0_21 = arith.constant 0 : index
    %c0_22 = arith.constant 0 : index
    %46 = vector.load %arg5[%c0_21, %c0_22] : memref<16x32xf32, #tpu.memory_space<vmem>>, vector<16x32xf32>
    tpu.vector_store %arg5[%c0_21, %c0_22], %45 {strides = array<i32>} : memref<16x32xf32, #tpu.memory_space<vmem>>, vector<16x32xf32>,
    return
  }
}

</mosaic_0001>

<llo_original>
// kernel: tpu_custom_call.1
$region0: #{tpu_custom_call.1}
  #allocation0 [shape = 'u32[]', space=smem, size = 0x4, offset = 0x4, fixed_abs, tag = 'smem constant byte address 0x4 - core index']
  #allocation1 [shape = 'u32[72,128]{1,0:T(1,128)}', space=vmem, size = 0x9000, scoped, tag = 'internal scratch']
  %s0 = inlined_call_operand.hbm [shape: f32[16,32], index: 0, kind: input, shape index: {}]
  %s1 = inlined_call_operand.vmem [shape: f32[32,128], index: 1, kind: input, shape index: {}]
  %s2 = inlined_call_operand.vmem [shape: f32[128,128], index: 2, kind: input, shape index: {}]
  %s3 = inlined_call_operand.vmem [shape: f32[128,32], index: 3, kind: input, shape index: {}]
  %s4 = inlined_call_operand.hbm [shape: f32[4,128], index: 4, kind: input, shape index: {}]
  %s5 = inlined_call_operand.hbm [shape: f32[16,32], index: 5, kind: output, shape index: {}]
  %s6 = sld [smem:[#allocation0]]
  $region38: #{tpu_custom_call.1} parent=0
    _
  %s8 = ssub.s32 1, %s6
  %s9 = scalar_select 0, %s8, %s6
  $region1: #{tpu_custom_call.1} parent=0
    #allocation2 [shape = 'u8[8192]{0}', space=vmem, size = 0x2000, scoped, tag = 'input window, operand 0, single buffered']
    #allocation3 [shape = 's32[1]{0}', space=sflag, size = 0x4, scoped, tag = 'scoped memory for tpu_custom_call.1']
    #allocation4 [shape = 's32[1]{0}', space=sflag, size = 0x4, scoped, tag = 'scoped memory for tpu_custom_call.1']
    #allocation5 [shape = 'u8[2048]{0}', space=vmem, size = 0x800, scoped, tag = 'input window, operand 4, single buffered']
    #allocation6 [shape = 's32[1]{0}', space=sflag, size = 0x4, scoped, tag = 'scoped memory for tpu_custom_call.1']
    #allocation7 [shape = 'u8[8192]{0}', space=vmem, size = 0x2000, scoped, tag = 'output window, operand 0, single buffered']
    %10 = vsyncpa [#allocation3], 0
    %11 = vsyncpa [#allocation6], 0
    %12 = vsyncpa [#allocation4], 0
    // Predicated region
    $region2: #{tpu_custom_call.1} parent=1 // pred_check
      _
    $region3: #{tpu_custom_call.1} parent=1 // pred_check_branch
      %14 = sbr.rel (0) target = $region5
    $region4: #{tpu_custom_call.1} parent=1 // pred_region
      %16 = vsyncadd [#allocation3], 0
      %s17 = sshll.u32 %s0, 4
      %s18 = int_to_ptr.hbm [resolvable:$true] %s17
      %s19 = sshll.u32 [#allocation2], 4
      %s20 = int_to_ptr.vmem [resolvable:$true] %s19
      %25 = dma.hbm_to_vmem [thread:$0]  %s18, 256, %s20, [#allocation3], 128, 128, 8
    $region5: #{tpu_custom_call.1} parent=1 // pred_fallthru
      _
    // Predicated region
    $region6: #{tpu_custom_call.1} parent=1 // pred_check
      _
    $region7: #{tpu_custom_call.1} parent=1 // pred_check_branch
      %27 = sbr.rel (0) target = $region9
    $region8: #{tpu_custom_call.1} parent=1 // pred_region
      _
    $region9: #{tpu_custom_call.1} parent=1 // pred_fallthru
      _
    // Predicated region
    $region10: #{tpu_custom_call.1} parent=1 // pred_check
      _
    $region11: #{tpu_custom_call.1} parent=1 // pred_check_branch
      %29 = sbr.rel (0) target = $region13
    $region12: #{tpu_custom_call.1} parent=1 // pred_region
      _
    $region13: #{tpu_custom_call.1} parent=1 // pred_fallthru
      _
    // Predicated region
    $region14: #{tpu_custom_call.1} parent=1 // pred_check
      _
    $region15: #{tpu_custom_call.1} parent=1 // pred_check_branch
      %31 = sbr.rel (0) target = $region17
    $region16: #{tpu_custom_call.1} parent=1 // pred_region
      _
    $region17: #{tpu_custom_call.1} parent=1 // pred_fallthru
      _
    // Predicated region
    $region18: #{tpu_custom_call.1} parent=1 // pred_check
      _
    $region19: #{tpu_custom_call.1} parent=1 // pred_check_branch
      %33 = sbr.rel (0) target = $region21
    $region20: #{tpu_custom_call.1} parent=1 // pred_region
      %35 = vsyncadd [#allocation6], 0
      %s37 = sshll.u32 %s4, 4
      %s38 = int_to_ptr.hbm [resolvable:$true] %s37
      %s39 = sshll.u32 [#allocation5], 4
      %s40 = int_to_ptr.vmem [resolvable:$true] %s39
      %42 = dma.hbm_to_vmem [thread:$0]  %s38, 64, %s40, [#allocation6]
    $region21: #{tpu_custom_call.1} parent=1 // pred_fallthru
      _
    // Predicated region
    $region22: #{tpu_custom_call.1} parent=1 // pred_check
      _
    $region23: #{tpu_custom_call.1} parent=1 // pred_check_branch
      %44 = sbr.rel (0) target = $region25
    $region24: #{tpu_custom_call.1} parent=1 // pred_region
      %46 = dma.done [#allocation3], 256
    $region25: #{tpu_custom_call.1} parent=1 // pred_fallthru
      _
    // Predicated region
    $region26: #{tpu_custom_call.1} parent=1 // pred_check
      _
    $region27: #{tpu_custom_call.1} parent=1 // pred_check_branch
      %48 = sbr.rel (0) target = $region29
    $region28: #{tpu_custom_call.1} parent=1 // pred_region
      %50 = dma.done [#allocation6], 64
    $region29: #{tpu_custom_call.1} parent=1 // pred_fallthru
      _
    %v51 = vld [vmem:[#allocation2] sm:$0xff]
    %v52 = vld [vmem:[#allocation2 + $0x8] sm:$0xff]
    %v53 = vld [vmem:[#allocation5] sm:$0x1]
    %v54 = vld [vmem:[#allocation5 + $0x1] sm:$0x1]
    %v55 = vld [vmem:[#allocation5 + $0x2] sm:$0x1]
    %v56 = vld [vmem:[#allocation5 + $0x3] sm:$0x1]
    %v57 = vld [vmem:[%s1] sm:$0xff]
    %v58 = vld [vmem:[%s1 + $0x8] sm:$0xff]
    %v59 = vld [vmem:[%s1 + $0x10] sm:$0xff]
    %v60 = vld [vmem:[%s1 + $0x18] sm:$0xff]
    %v61 = vperm.slane %v53, 0
    %vm62 = vcmask 261120
    %v64 = vsel %vm62, %v51, 0
    %v67 = vsel %vm62, %v52, 0
    %69 = vmatpush.msra.mxu0 0.0
    %70 = vmatpush.msra.mxu0 0.0
    %71 = vmatpush.msra.mxu0 0.0
    %72 = vmatpush.msra.mxu0 0.0
    %73 = vmatpush.msra.mxu0 0.0
    %74 = vmatpush.msra.mxu0 0.0
    %75 = vmatpush.msra.mxu0 0.0
    %76 = vmatpush.msra.mxu0 0.0
    %77 = vmatpush.msra.mxu0 0.0
    %78 = vmatpush.msra.mxu0 0.0
    %79 = vmatpush.msra.mxu0 0.0
    %80 = vmatpush.msra.mxu0 0.0
    %81 = vmatpush.msra.mxu0 %v60
    %82 = vmatpush.msra.mxu0 %v59
    %83 = vmatpush.msra.mxu0 %v58
    %84 = vmatpush.msra.mxu0 %v57
    %85 = vmatmul.f32.gmra.mxu0 %v64
    %v86 = vpop.f32.mrf.mxu0
    %v87 = vadd.f32 %v61, %v86
    %88 = vmatmul.f32.gmra.mxu0 %v67
    %v89 = vpop.f32.mrf.mxu0
    %v90 = vadd.f32 %v61, %v89
    %91 = vdwg.mxu0
    %92 = vmax.xlane.f32.xlu0 %v87
    %v93 = vpop.xlane.xlu0 %92
    %94 = vmax.xlane.f32.xlu0 %v90
    %v95 = vpop.xlane.xlu0 %94
    %v96 = vsub.f32 %v87, %v93
    %v97 = vsub.f32 %v90, %v95
    %v98 = vmul.f32 %v96, 1.442695
    %v99 = vpow.pop %v98
    %v100 = vmul.f32 %v97, 1.442695
    %v101 = vpow.pop %v100
    %v102 = vld [vmem:[%s2] sm:$0xff]
    %v103 = vld [vmem:[%s2 + $0x8] sm:$0xff]
    %v104 = vld [vmem:[%s2 + $0x10] sm:$0xff]
    %v105 = vld [vmem:[%s2 + $0x18] sm:$0xff]
    %v106 = vld [vmem:[%s2 + $0x20] sm:$0xff]
    %v107 = vld [vmem:[%s2 + $0x28] sm:$0xff]
    %v108 = vld [vmem:[%s2 + $0x30] sm:$0xff]
    %v109 = vld [vmem:[%s2 + $0x38] sm:$0xff]
    %v110 = vld [vmem:[%s2 + $0x40] sm:$0xff]
    %v111 = vld [vmem:[%s2 + $0x48] sm:$0xff]
    %v112 = vld [vmem:[%s2 + $0x50] sm:$0xff]
    %v113 = vld [vmem:[%s2 + $0x58] sm:$0xff]
    %v114 = vld [vmem:[%s2 + $0x60] sm:$0xff]
    %v115 = vld [vmem:[%s2 + $0x68] sm:$0xff]
    %v116 = vld [vmem:[%s2 + $0x70] sm:$0xff]
    %v117 = vld [vmem:[%s2 + $0x78] sm:$0xff]
    %118 = vmatpush.msra.mxu0 %v117
    %119 = vmatpush.msra.mxu0 %v116
    %120 = vmatpush.msra.mxu0 %v115
    %121 = vmatpush.msra.mxu0 %v114
    %122 = vmatpush.msra.mxu0 %v113
    %123 = vmatpush.msra.mxu0 %v112
    %124 = vmatpush.msra.mxu0 %v111
    %125 = vmatpush.msra.mxu0 %v110
    %126 = vmatpush.msra.mxu0 %v109
    %127 = vmatpush.msra.mxu0 %v108
    %128 = vmatpush.msra.mxu0 %v107
    %129 = vmatpush.msra.mxu0 %v106
    %130 = vmatpush.msra.mxu0 %v105
    %131 = vmatpush.msra.mxu0 %v104
    %132 = vmatpush.msra.mxu0 %v103
    %133 = vmatpush.msra.mxu0 %v102
    %134 = vmatmul.f32.gmra.mxu0 %v99
    %v135 = vpop.f32.mrf.mxu0
    %v136 = vadd.f32 0.0, %v135
    %137 = vmatmul.f32.gmra.mxu0 %v101
    %v138 = vpop.f32.mrf.mxu0
    %v139 = vadd.f32 0.0, %v138
    %140 = vdwg.mxu0
    %v141 = vmax.f32 %v136, 1e-30
    %v142 = vmax.f32 %v139, 1e-30
    %v143 = vrcp.pop %v141
    %v144 = vmul.f32 %v141, %v143
    %v145 = vsub.f32 1.0, %v144
    %v146 = vmul.f32 %v143, %v145
    %v147 = vadd.f32 %v143, %v146
    %vm148 = vweird.f32 %v141
    %vm149 = vweird.f32 %v143
    %vm150 = vmor %vm148, %vm149
    %v151 = vsel %vm150, %v143, %v147
    %v152 = vand.u32 2147483647, %v141
    %vm153 = vcmp.eq.f32.partialorder %v152, 8.507059e+37
    %v154 = vand.u32 %v141, 2147483648
    %v155 = vor.u32 1.1754944e-38, %v154
    %v156 = vsel %vm153, %v155, %v151
    %v157 = vmul.f32 %v99, %v156
    %v158 = vrcp.pop %v142
    %v159 = vmul.f32 %v142, %v158
    %v160 = vsub.f32 1.0, %v159
    %v161 = vmul.f32 %v158, %v160
    %v162 = vadd.f32 %v158, %v161
    %vm163 = vweird.f32 %v142
    %vm164 = vweird.f32 %v158
    %vm165 = vmor %vm163, %vm164
    %v166 = vsel %vm165, %v158, %v162
    %v167 = vand.u32 2147483647, %v142
    %vm168 = vcmp.eq.f32.partialorder %v167, 8.507059e+37
    %v169 = vand.u32 %v142, 2147483648
    %v170 = vor.u32 1.1754944e-38, %v169
    %v171 = vsel %vm168, %v170, %v166
    %v172 = vmul.f32 %v101, %v171
    %v173 = vld [vmem:[%s3] sm:$0xff]
    %v174 = vld [vmem:[%s3 + $0x8] sm:$0xff]
    %v175 = vld [vmem:[%s3 + $0x10] sm:$0xff]
    %v176 = vld [vmem:[%s3 + $0x18] sm:$0xff]
    %v177 = vld [vmem:[%s3 + $0x20] sm:$0xff]
    %v178 = vld [vmem:[%s3 + $0x28] sm:$0xff]
    %v179 = vld [vmem:[%s3 + $0x30] sm:$0xff]
    %v180 = vld [vmem:[%s3 + $0x38] sm:$0xff]
    %v181 = vld [vmem:[%s3 + $0x40] sm:$0xff]
    %v182 = vld [vmem:[%s3 + $0x48] sm:$0xff]
    %v183 = vld [vmem:[%s3 + $0x50] sm:$0xff]
    %v184 = vld [vmem:[%s3 + $0x58] sm:$0xff]
    %v185 = vld [vmem:[%s3 + $0x60] sm:$0xff]
    %v186 = vld [vmem:[%s3 + $0x68] sm:$0xff]
    %v187 = vld [vmem:[%s3 + $0x70] sm:$0xff]
    %v188 = vld [vmem:[%s3 + $0x78] sm:$0xff]
    %v189 = vperm.slane %v54, 0
    %190 = vmatpush.msra.mxu0 %v188
    %191 = vmatpush.msra.mxu0 %v187
    %192 = vmatpush.msra.mxu0 %v186
    %193 = vmatpush.msra.mxu0 %v185
    %194 = vmatpush.msra.mxu0 %v184
    %195 = vmatpush.msra.mxu0 %v183
    %196 = vmatpush.msra.mxu0 %v182
    %197 = vmatpush.msra.mxu0 %v181
    %198 = vmatpush.msra.mxu0 %v180
    %199 = vmatpush.msra.mxu0 %v179
    %200 = vmatpush.msra.mxu0 %v178
    %201 = vmatpush.msra.mxu0 %v177
    %202 = vmatpush.msra.mxu0 %v176
    %203 = vmatpush.msra.mxu0 %v175
    %204 = vmatpush.msra.mxu0 %v174
    %205 = vmatpush.msra.mxu0 %v173
    %206 = vmatmul.f32.gmra.mxu0 %v157
    %v207 = vpop.f32.mrf.mxu0
    %v208 = vadd.f32 %v189, %v207
    %209 = vmatmul.f32.gmra.mxu0 %v172
    %v210 = vpop.f32.mrf.mxu0
    %v211 = vadd.f32 %v189, %v210
    %212 = vdwg.mxu0
    %v213 = vadd.f32 %v208, %v51
    %v214 = vadd.f32 %v211, %v52
    %v215 = vsel %vm62, %v213, 0.0
    %216 = vadd.xlane.f32.xlu0 %v215
    %v217 = vpop.xlane.xlu0 %216
    %v218 = vsel %vm62, %v214, 0.0
    %219 = vadd.xlane.f32.xlu0 %v218
    %v220 = vpop.xlane.xlu0 %219
    %v221 = vrcp.pop 32.0
    %v222 = vmul.f32 32.0, %v221
    %v223 = vsub.f32 1.0, %v222
    %v224 = vmul.f32 %v221, %v223
    %v225 = vadd.f32 %v221, %v224
    %vm226 = vweird.f32 %v221
    %v227 = vsel %vm226, %v221, %v225
    %v228 = vmul.f32 %v217, %v227
    %v229 = vmul.f32 %v220, %v227
    %v230 = vsub.f32 %v213, %v228
    %v231 = vsub.f32 %v214, %v229
    %v232 = vmul.f32 %v230, %v230
    %v233 = vmul.f32 %v231, %v231
    %v234 = vsel %vm62, %v232, 0.0
    %235 = vadd.xlane.f32.xlu0 %v234
    %v236 = vpop.xlane.xlu0 %235
    %v237 = vsel %vm62, %v233, 0.0
    %238 = vadd.xlane.f32.xlu0 %v237
    %v239 = vpop.xlane.xlu0 %238
    %v240 = vmul.f32 %v236, %v227
    %v241 = vmul.f32 %v239, %v227
    %v242 = vadd.f32 %v240, 1e-05
    %v243 = vadd.f32 %v241, 1e-05
    %v244 = vrsqrt.pop %v242
    %v245 = vmul.f32 %v244, %v242
    %v246 = vmul.f32 %v245, %v244
    %v247 = vmul.f32 0.5, %v246
    %v248 = vsub.f32 1.5, %v247
    %v249 = vmul.f32 %v244, %v248
    %vm250 = vweird.f32 %v242
    %vm251 = vweird.f32 %v244
    %vm252 = vmor %vm250, %vm251
    %v253 = vsel %vm252, %v244, %v249
    %v254 = vrsqrt.pop %v243
    %v255 = vmul.f32 %v254, %v243
    %v256 = vmul.f32 %v255, %v254
    %v257 = vmul.f32 0.5, %v256
    %v258 = vsub.f32 1.5, %v257
    %v259 = vmul.f32 %v254, %v258
    %vm260 = vweird.f32 %v243
    %vm261 = vweird.f32 %v254
    %vm262 = vmor %vm260, %vm261
    %v263 = vsel %vm262, %v254, %v259
    %v264 = vmul.f32 %v230, %v253
    %v265 = vmul.f32 %v231, %v263
    %v266 = vperm.slane %v55, 0
    %v267 = vmul.f32 %v264, %v266
    %v268 = vmul.f32 %v265, %v266
    %v269 = vperm.slane %v56, 0
    %v270 = vadd.f32 %v267, %v269
    %v271 = vadd.f32 %v268, %v269
    %272 = vst.msk [vmem:[#allocation7] sm:$0xff] %vm62, %v270
    %273 = vst.msk [vmem:[#allocation7 + $0x8] sm:$0xff] %vm62, %v271
    // Predicated region
    $region30: #{tpu_custom_call.1} parent=1 // pred_check
      _
    $region31: #{tpu_custom_call.1} parent=1 // pred_check_branch
      %275 = sbr.rel (0) target = $region33
    $region32: #{tpu_custom_call.1} parent=1 // pred_region
      %277 = vsyncadd [#allocation4], 0
      %s278 = sshll.u32 [#allocation7], 4
      %s279 = int_to_ptr.vmem [resolvable:$true] %s278
      %s280 = sshll.u32 %s5, 4
      %s281 = int_to_ptr.hbm [resolvable:$true] %s280
      %286 = dma.vmem_to_hbm [thread:$0]  %s279, 256, %s281, [#allocation4], 128, 128, 8
    $region33: #{tpu_custom_call.1} parent=1 // pred_fallthru
      _
    // Predicated region
    $region34: #{tpu_custom_call.1} parent=1 // pred_check
      _
    $region35: #{tpu_custom_call.1} parent=1 // pred_check_branch
      %288 = sbr.rel (0) target = $region37
    $region36: #{tpu_custom_call.1} parent=1 // pred_region
      %290 = dma.done [#allocation4], 256
    $region37: #{tpu_custom_call.1} parent=1 // pred_fallthru
      _
    %291 = vsyncpa [#allocation3], 1
    %292 = vsyncpa [#allocation6], 1
    %293 = vsyncpa [#allocation4], 1

</llo_original>
